<compile_context>
chip_gen: v6e
topology: v6e:2x2x1
jax: 0.10.0
libtpu: 0.0.40
codegen_flags: <defaults>
</compile_context>

<pallas_src>
import math

import jax
import jax.numpy as jnp
from jax import lax
from jax.experimental import pallas as pl
from jax.experimental.pallas import tpu as pltpu

KSIZE = 5
PAD = 4
NCH = 3


def _gaussian_taps_1d():
    """Normalized 1D gaussian taps; outer(t, t) == the module's normalized 5x5 kernel."""
    mean = (KSIZE - 1) / 2.0
    variance = (KSIZE / 6.0) ** 2.0
    g = [math.exp(-((i - mean) ** 2) / (2.0 * variance)) for i in range(KSIZE)]
    s = sum(g)
    return tuple(v / s for v in g)


_TAPS = _gaussian_taps_1d()   # compile-time constants folded into the kernel


def _gaussian_blur_kernel(x_ref, o_ref, xp_ref, tmp_ref):
    # x_ref  : (G, H, W)    unpadded input planes for this grid step (VMEM)
    # o_ref  : (G, Ho, Wo)  output planes, Ho = H + 4, Wo = W + 4
    # xp_ref : (G, Hp, Wp)  f32 scratch: zero-padded input, Hp = H + 8, Wp = W + 8
    # tmp_ref: (G, Hp, Wo)  f32 scratch: horizontal-pass result
    g, h, w = x_ref.shape
    _, ho, wo = o_ref.shape
    hp, wp = h + 2 * PAD, w + 2 * PAD

    # --- In-kernel zero padding: zero ONLY the 4-wide halo strips (per grid step),
    # then write the interior exactly once (single upcast).
    xp_ref[:, 0:PAD, :] = jnp.zeros((g, PAD, wp), jnp.float32)            # top rows
    xp_ref[:, PAD + h:, :] = jnp.zeros((g, PAD, wp), jnp.float32)          # bottom rows
    xp_ref[:, PAD:PAD + h, 0:PAD] = jnp.zeros((g, h, PAD), jnp.float32)    # left cols
    xp_ref[:, PAD:PAD + h, PAD + w:] = jnp.zeros((g, h, PAD), jnp.float32)  # right cols
    xp_ref[:, PAD:PAD + h, PAD:PAD + w] = x_ref[...].astype(jnp.float32)   # interior

    t = _TAPS

    # --- Horizontal (lane-axis) pass -> tmp scratch.
    # Two independent accumulator chains for VALU ILP; halo rows of xp are zero, so
    # the corresponding tmp rows come out zero with no special casing.
    h0 = t[0] * xp_ref[:, :, 0:wo] + t[1] * xp_ref[:, :, 1:1 + wo]
    h1 = t[2] * xp_ref[:, :, 2:2 + wo] + t[3] * xp_ref[:, :, 3:3 + wo]
    tmp_ref[...] = (h0 + t[4] * xp_ref[:, :, 4:4 + wo]) + h1

    # --- Vertical (sublane-axis) pass from tmp_ref -> output.
    v0 = t[0] * tmp_ref[:, 0:ho, :] + t[1] * tmp_ref[:, 1:1 + ho, :]
    v1 = t[2] * tmp_ref[:, 2:2 + ho, :] + t[3] * tmp_ref[:, 3:3 + ho, :]
    o_ref[...] = ((v0 + t[4] * tmp_ref[:, 4:4 + ho, :]) + v1).astype(o_ref.dtype)


def _planes_per_step(n_planes, h, w, budget_bytes=4 << 20):
    """Planes per grid step: biggest divisor of n_planes whose working set fits the
    budget, preferring >= 2 grid steps (so v7x's two TensorCores both get work)."""
    hp, wp = h + 2 * PAD, w + 2 * PAD
    ho, wo = h + PAD, w + PAD
    per_plane = (2 * h * w * 4            # double-buffered input block
                 + 2 * ho * wo * 4        # double-buffered output block
                 + hp * wp * 4            # padded-input scratch
                 + hp * wo * 4)           # horizontal-pass scratch
    max_g = max(1, budget_bytes // per_plane)
    divisors = [d for d in range(1, n_planes + 1) if n_planes % d == 0]
    fit = [d for d in divisors if d <= max_g] or [1]
    two_step = [d for d in fit if n_planes // d >= 2]
    return (two_step or fit)[-1]


def gaussian_filter(x):
    """Equivalent of GaussianFilter.forward for NCHW input (C == 3)."""
    n, c, h, w = x.shape
    hp, wp = h + 2 * PAD, w + 2 * PAD
    ho, wo = hp - KSIZE + 1, wp - KSIZE + 1                 # = H + 4, W + 4

    # Depthwise filter with identical taps per channel -> fold channels into the
    # plane axis and block several planes per grid step.
    planes = n * c
    g = _planes_per_step(planes, h, w)
    x_flat = x.reshape(planes, h, w)

    grid_spec = pltpu.PrefetchScalarGridSpec(
        num_scalar_prefetch=0,
        grid=(planes // g,),
        in_specs=[pl.BlockSpec((g, h, w), lambda i: (i, 0, 0))],
        out_specs=pl.BlockSpec((g, ho, wo), lambda i: (i, 0, 0)),
        scratch_shapes=[
            pltpu.VMEM((g, hp, wp), jnp.float32),   # padded input
            pltpu.VMEM((g, hp, wo), jnp.float32),   # horizontal-pass result
        ],
    )

    out_flat = pl.pallas_call(
        _gaussian_blur_kernel,
        out_shape=jax.ShapeDtypeStruct((planes, ho, wo), x.dtype),
        grid_spec=grid_spec,
        compiler_params=pltpu.CompilerParams(
            dimension_semantics=("parallel",),
            vmem_limit_bytes=48 * 1024 * 1024,
        ),
    )(x_flat)
    return out_flat.reshape(n, c, ho, wo)


def _gaussian_weight_2d():
    # Reference re-creation of the weights built in GaussianFilter.__init__ (f32).
    mean = (KSIZE - 1) / 2.0
    variance = (KSIZE / 6.0) ** 2.0
    coords = jnp.arange(KSIZE, dtype=jnp.float32)
    g = jnp.exp(-((coords[None, :] - mean) ** 2 + (coords[:, None] - mean) ** 2)
                / (2.0 * variance))
    g = g / jnp.sum(g)
    return jnp.broadcast_to(g, (NCH, KSIZE, KSIZE)).astype(jnp.float32)


if __name__ == "__main__":
    key = jax.random.PRNGKey(0)
    x = jax.random.normal(key, (2, NCH, 16, 16), dtype=jnp.float32)

    out = jax.block_until_ready(gaussian_filter(x))

    # Reference: XLA grouped conv == nn.Conv2d(3,3,5,stride=1,padding=4,groups=3).
    w2d = _gaussian_weight_2d()
    ref = lax.conv_general_dilated(
        x, w2d[:, None, :, :],
        window_strides=(1, 1),
        padding=((PAD, PAD), (PAD, PAD)),
        dimension_numbers=("NCHW", "OIHW", "NCHW"),
        feature_group_count=NCH,
        precision=lax.Precision.HIGHEST,
    )

    assert out.shape == (2, NCH, 20, 20), out.shape
    assert jnp.allclose(out, ref, atol=1e-5, rtol=1e-5), float(jnp.max(jnp.abs(out - ref)))
    print("KERNEL_OK")
</pallas_src>

<mosaic_0001>
module attributes {stable_mosaic.version = 11 : i64} {
  func.func @_gaussian_blur_kernel(%arg0: i32, %arg1: memref<3x16x16xf32, #tpu.memory_space<vmem>>, %arg2: memref<3x20x20xf32, #tpu.memory_space<vmem>>, %arg3: memref<3x24x24xf32, #tpu.memory_space<vmem>>, %arg4: memref<3x24x20xf32, #tpu.memory_space<vmem>>) attributes {dimension_semantics = [#tpu.dimension_semantics<parallel>], iteration_bounds = array<i64: 2>, scalar_prefetch = 0 : i64, scratch_operands = 2 : i64, tpu.core_type = #tpu.core_type<tc>, window_params = [{transform_indices = @transform_0, window_bounds = array<i64: 3, 16, 16>}, {transform_indices = @transform_1, window_bounds = array<i64: 3, 20, 20>}]} {
    %cst = arith.constant 0.000000e+00 : f32
    %0 = vector.broadcast %cst : f32 to vector<3x4x24xf32>
    %c0 = arith.constant 0 : index
    %c0_0 = arith.constant 0 : index
    %c0_1 = arith.constant 0 : index
    %1 = vector.load %arg3[%c0, %c0_0, %c0_1] : memref<3x24x24xf32, #tpu.memory_space<vmem>>, vector<3x4x24xf32>
    tpu.vector_store %arg3[%c0, %c0_0, %c0_1], %0 {strides = array<i32>} : memref<3x24x24xf32, #tpu.memory_space<vmem>>, vector<3x4x24xf32>,
    %cst_2 = arith.constant 0.000000e+00 : f32
    %2 = vector.broadcast %cst_2 : f32 to vector<3x4x24xf32>
    %c0_3 = arith.constant 0 : index
    %c20 = arith.constant 20 : index
    %c0_4 = arith.constant 0 : index
    %3 = vector.load %arg3[%c0_3, %c20, %c0_4] : memref<3x24x24xf32, #tpu.memory_space<vmem>>, vector<3x4x24xf32>
    tpu.vector_store %arg3[%c0_3, %c20, %c0_4], %2 {strides = array<i32>} : memref<3x24x24xf32, #tpu.memory_space<vmem>>, vector<3x4x24xf32>,
    %cst_5 = arith.constant 0.000000e+00 : f32
    %4 = vector.broadcast %cst_5 : f32 to vector<3x16x4xf32>
    %c0_6 = arith.constant 0 : index
    %c4 = arith.constant 4 : index
    %c0_7 = arith.constant 0 : index
    %5 = vector.load %arg3[%c0_6, %c4, %c0_7] : memref<3x24x24xf32, #tpu.memory_space<vmem>>, vector<3x16x4xf32>
    tpu.vector_store %arg3[%c0_6, %c4, %c0_7], %4 {strides = array<i32>} : memref<3x24x24xf32, #tpu.memory_space<vmem>>, vector<3x16x4xf32>,
    %cst_8 = arith.constant 0.000000e+00 : f32
    %6 = vector.broadcast %cst_8 : f32 to vector<3x16x4xf32>
    %c0_9 = arith.constant 0 : index
    %c4_10 = arith.constant 4 : index
    %c20_11 = arith.constant 20 : index
    %7 = vector.load %arg3[%c0_9, %c4_10, %c20_11] : memref<3x24x24xf32, #tpu.memory_space<vmem>>, vector<3x16x4xf32>
    tpu.vector_store %arg3[%c0_9, %c4_10, %c20_11], %6 {strides = array<i32>} : memref<3x24x24xf32, #tpu.memory_space<vmem>>, vector<3x16x4xf32>,
    %c0_12 = arith.constant 0 : index
    %c0_13 = arith.constant 0 : index
    %c0_14 = arith.constant 0 : index
    %8 = vector.load %arg1[%c0_12, %c0_13, %c0_14] : memref<3x16x16xf32, #tpu.memory_space<vmem>>, vector<3x16x16xf32>
    %c0_15 = arith.constant 0 : index
    %c4_16 = arith.constant 4 : index
    %c4_17 = arith.constant 4 : index
    %9 = vector.load %arg3[%c0_15, %c4_16, %c4_17] : memref<3x24x24xf32, #tpu.memory_space<vmem>>, vector<3x16x16xf32>
    tpu.vector_store %arg3[%c0_15, %c4_16, %c4_17], %8 {strides = array<i32>} : memref<3x24x24xf32, #tpu.memory_space<vmem>>, vector<3x16x16xf32>,
    %c0_18 = arith.constant 0 : index
    %c0_19 = arith.constant 0 : index
    %c0_20 = arith.constant 0 : index
    %10 = vector.load %arg3[%c0_18, %c0_19, %c0_20] : memref<3x24x24xf32, #tpu.memory_space<vmem>>, vector<3x24x20xf32>
    %cst_21 = arith.constant 0.0269131567 : f32
    %11 = vector.broadcast %cst_21 : f32 to vector<3x24x20xf32>
    %12 = arith.mulf %11, %10 : vector<3x24x20xf32>
    %c0_22 = arith.constant 0 : index
    %c0_23 = arith.constant 0 : index
    %c1 = arith.constant 1 : index
    %13 = vector.load %arg3[%c0_22, %c0_23, %c1] : memref<3x24x24xf32, #tpu.memory_space<vmem>>, vector<3x24x20xf32>
    %cst_24 = arith.constant 0.233367682 : f32
    %14 = vector.broadcast %cst_24 : f32 to vector<3x24x20xf32>
    %15 = arith.mulf %14, %13 : vector<3x24x20xf32>
    %16 = arith.addf %12, %15 : vector<3x24x20xf32>
    %c0_25 = arith.constant 0 : index
    %c0_26 = arith.constant 0 : index
    %c2 = arith.constant 2 : index
    %17 = vector.load %arg3[%c0_25, %c0_26, %c2] : memref<3x24x24xf32, #tpu.memory_space<vmem>>, vector<3x24x20xf32>
    %cst_27 = arith.constant 0.479438305 : f32
    %18 = vector.broadcast %cst_27 : f32 to vector<3x24x20xf32>
    %19 = arith.mulf %18, %17 : vector<3x24x20xf32>
    %c0_28 = arith.constant 0 : index
    %c0_29 = arith.constant 0 : index
    %c3 = arith.constant 3 : index
    %20 = vector.load %arg3[%c0_28, %c0_29, %c3] : memref<3x24x24xf32, #tpu.memory_space<vmem>>, vector<3x24x20xf32>
    %cst_30 = arith.constant 0.233367682 : f32
    %21 = vector.broadcast %cst_30 : f32 to vector<3x24x20xf32>
    %22 = arith.mulf %21, %20 : vector<3x24x20xf32>
    %23 = arith.addf %19, %22 : vector<3x24x20xf32>
    %c0_31 = arith.constant 0 : index
    %c0_32 = arith.constant 0 : index
    %c4_33 = arith.constant 4 : index
    %24 = vector.load %arg3[%c0_31, %c0_32, %c4_33] : memref<3x24x24xf32, #tpu.memory_space<vmem>>, vector<3x24x20xf32>
    %cst_34 = arith.constant 0.0269131567 : f32
    %25 = vector.broadcast %cst_34 : f32 to vector<3x24x20xf32>
    %26 = arith.mulf %25, %24 : vector<3x24x20xf32>
    %27 = arith.addf %16, %26 : vector<3x24x20xf32>
    %28 = arith.addf %27, %23 : vector<3x24x20xf32>
    %c0_35 = arith.constant 0 : index
    %c0_36 = arith.constant 0 : index
    %c0_37 = arith.constant 0 : index
    %29 = vector.load %arg4[%c0_35, %c0_36, %c0_37] : memref<3x24x20xf32, #tpu.memory_space<vmem>>, vector<3x24x20xf32>
    tpu.vector_store %arg4[%c0_35, %c0_36, %c0_37], %28 {strides = array<i32>} : memref<3x24x20xf32, #tpu.memory_space<vmem>>, vector<3x24x20xf32>,
    %c0_38 = arith.constant 0 : index
    %c0_39 = arith.constant 0 : index
    %c0_40 = arith.constant 0 : index
    %30 = vector.load %arg4[%c0_38, %c0_39, %c0_40] : memref<3x24x20xf32, #tpu.memory_space<vmem>>, vector<3x20x20xf32>
    %cst_41 = arith.constant 0.0269131567 : f32
    %31 = vector.broadcast %cst_41 : f32 to vector<3x20x20xf32>
    %32 = arith.mulf %31, %30 : vector<3x20x20xf32>
    %c0_42 = arith.constant 0 : index
    %c1_43 = arith.constant 1 : index
    %c0_44 = arith.constant 0 : index
    %33 = vector.load %arg4[%c0_42, %c1_43, %c0_44] : memref<3x24x20xf32, #tpu.memory_space<vmem>>, vector<3x20x20xf32>
    %cst_45 = arith.constant 0.233367682 : f32
    %34 = vector.broadcast %cst_45 : f32 to vector<3x20x20xf32>
    %35 = arith.mulf %34, %33 : vector<3x20x20xf32>
    %36 = arith.addf %32, %35 : vector<3x20x20xf32>
    %c0_46 = arith.constant 0 : index
    %c2_47 = arith.constant 2 : index
    %c0_48 = arith.constant 0 : index
    %37 = vector.load %arg4[%c0_46, %c2_47, %c0_48] : memref<3x24x20xf32, #tpu.memory_space<vmem>>, vector<3x20x20xf32>
    %cst_49 = arith.constant 0.479438305 : f32
    %38 = vector.broadcast %cst_49 : f32 to vector<3x20x20xf32>
    %39 = arith.mulf %38, %37 : vector<3x20x20xf32>
    %c0_50 = arith.constant 0 : index
    %c3_51 = arith.constant 3 : index
    %c0_52 = arith.constant 0 : index
    %40 = vector.load %arg4[%c0_50, %c3_51, %c0_52] : memref<3x24x20xf32, #tpu.memory_space<vmem>>, vector<3x20x20xf32>
    %cst_53 = arith.constant 0.233367682 : f32
    %41 = vector.broadcast %cst_53 : f32 to vector<3x20x20xf32>
    %42 = arith.mulf %41, %40 : vector<3x20x20xf32>
    %43 = arith.addf %39, %42 : vector<3x20x20xf32>
    %c0_54 = arith.constant 0 : index
    %c4_55 = arith.constant 4 : index
    %c0_56 = arith.constant 0 : index
    %44 = vector.load %arg4[%c0_54, %c4_55, %c0_56] : memref<3x24x20xf32, #tpu.memory_space<vmem>>, vector<3x20x20xf32>
    %cst_57 = arith.constant 0.0269131567 : f32
    %45 = vector.broadcast %cst_57 : f32 to vector<3x20x20xf32>
    %46 = arith.mulf %45, %44 : vector<3x20x20xf32>
    %47 = arith.addf %36, %46 : vector<3x20x20xf32>
    %48 = arith.addf %47, %43 : vector<3x20x20xf32>
    %c0_58 = arith.constant 0 : index
    %c0_59 = arith.constant 0 : index
    %c0_60 = arith.constant 0 : index
    %49 = vector.load %arg2[%c0_58, %c0_59, %c0_60] : memref<3x20x20xf32, #tpu.memory_space<vmem>>, vector<3x20x20xf32>
    tpu.vector_store %arg2[%c0_58, %c0_59, %c0_60], %48 {strides = array<i32>} : memref<3x20x20xf32, #tpu.memory_space<vmem>>, vector<3x20x20xf32>,
    return
  }
  func.func @transform_0(%arg0: i32) -> (i32, i32, i32) {
    %c0_i32 = arith.constant 0 : i32
    %c0_i32_0 = arith.constant 0 : i32
    %c0_i32_1 = arith.constant 0 : i32
    return %arg0, %c0_i32, %c0_i32_0 : i32, i32, i32
  }
  func.func @transform_1(%arg0: i32) -> (i32, i32, i32) {
    %c0_i32 = arith.constant 0 : i32
    %c0_i32_0 = arith.constant 0 : i32
    %c0_i32_1 = arith.constant 0 : i32
    return %arg0, %c0_i32, %c0_i32_0 : i32, i32, i32
  }
}

</mosaic_0001>

<llo_original>
// kernel: tpu_custom_call.1
$region0: #{tpu_custom_call.1}
  #allocation0 [shape = 'u32[]', space=smem, size = 0x4, offset = 0x4, fixed_abs, tag = 'smem constant byte address 0x4 - core index']
  #allocation1 [shape = 'u32[144,128]{1,0:T(1,128)}', space=vmem, size = 0x12000, scoped, tag = 'internal scratch']
  #allocation2 [shape = 'f32[3,24,24]{2,1,0:T(8,128)}', space=vmem, size = 0x9000, scoped, tag = 'scratch operand']
  #allocation3 [shape = 'f32[3,24,20]{2,1,0:T(8,128)}', space=vmem, size = 0x9000, scoped, tag = 'scratch operand']
  %s0 = inlined_call_operand.hbm [shape: f32[6,16,16], index: 0, kind: input, shape index: {}]
  %s1 = inlined_call_operand.hbm [shape: f32[6,20,20], index: 1, kind: output, shape index: {}]
  %s2 = sld [smem:[#allocation0]]
  $region41: #{tpu_custom_call.1} parent=0
    _
  %s4 = ssub.s32 1, %s2
  %s5 = scalar_select 0, %s4, %s2
  $region1: #{tpu_custom_call.1} parent=0
    #allocation4 [shape = 'u8[49152]{0}', space=vmem, size = 0xc000, scoped, tag = 'input window, operand 0']
    #allocation5 [shape = 's32[2]{0}', space=sflag, size = 0x8, scoped, tag = 'scoped memory for tpu_custom_call.1']
    #allocation6 [shape = 's32[2]{0}', space=sflag, size = 0x8, scoped, tag = 'scoped memory for tpu_custom_call.1']
    #allocation7 [shape = 'u8[73728]{0}', space=vmem, size = 0x12000, scoped, tag = 'output window, operand 0']
    %6 = vsyncpa [#allocation5], 0
    %s7 = scalar_lea.sflag [#allocation5], 1
    %8 = vsyncpa %s7, 0
    %9 = vsyncpa [#allocation6], 0
    %s10 = scalar_lea.sflag [#allocation6], 1
    %11 = vsyncpa %s10, 0
    loop: start=0, step=1, limit=4
    $region2: #{tpu_custom_call.1} parent=1 // loop_pre_header
      _
    $region3: #{tpu_custom_call.1} parent=1 // loop_header
      %s13 = sphi 0, %s17
      %p14 = scmp.ge.s32.totalorder %s13, 4
      %s23 = sphi 0, %s25
      %s26 = sphi 0, %s23
      %s27 = sphi 0, %s26
      %s43 = sphi 0, %s27
      %s49 = sphi 0, %s51
      %s52 = sphi 0, %s49
      %s53 = sphi 0, %s52
      %s69 = sphi 0, %s53
    $region4: #{tpu_custom_call.1} parent=1 // loop_header_branch
      %16 = sbr.rel (%p14) target = $region8
    $region5: #{tpu_custom_call.1} parent=1 // loop_body
      %s18 = ssub.s32 %s13, 1
      %s19 = ssub.s32 %s13, 2
      %s20 = sadd.s32 %s13, 1
      %s21 = ssub.s32 %s13, %s20
      %p22 = scmp.eq.s32.totalorder %s21, 0
      %s24 = sadd.s32 %s23, 1
      %s25 = scalar_select %p22, %s23, %s24
      %p28 = pneg %p22
      %p29 = scmp.eq.s32.totalorder %s13, 1
      %p30 = por %p28, %p29
      %p31 = scmp.ne.s32.totalorder %s23, %s26
      %p32 = scmp.eq.s32.totalorder %s13, 0
      %p33 = por %p31, %p32
      %p34 = scmp.ne.s32.totalorder %s23, %s26
      %p35 = scmp.eq.s32.totalorder %s18, 1
      %p36 = por %p34, %p35
      %p37 = scmp.ne.s32.totalorder %s26, %s27
      %p38 = scmp.eq.s32.totalorder %s18, 0
      %p39 = por %p37, %p38
      %p40 = scmp.ne.s32.totalorder %s26, %s27
      %p41 = scmp.eq.s32.totalorder %s19, 1
      %p42 = por %p40, %p41
      %p44 = scmp.ne.s32.totalorder %s27, %s43
      %p45 = scmp.eq.s32.totalorder %s19, 0
      %p46 = por %p44, %p45
      %s47 = ssub.s32 %s13, %s20
      %p48 = scmp.eq.s32.totalorder %s47, 0
      %s50 = sadd.s32 %s49, 1
      %s51 = scalar_select %p48, %s49, %s50
      %p54 = pneg %p48
      %p55 = scmp.eq.s32.totalorder %s13, 1
      %p56 = por %p54, %p55
      %p57 = scmp.ne.s32.totalorder %s49, %s52
      %p58 = scmp.eq.s32.totalorder %s13, 0
      %p59 = por %p57, %p58
      %p60 = scmp.ne.s32.totalorder %s49, %s52
      %p61 = scmp.eq.s32.totalorder %s18, 1
      %p62 = por %p60, %p61
      %p63 = scmp.ne.s32.totalorder %s52, %s53
      %p64 = scmp.eq.s32.totalorder %s18, 0
      %p65 = por %p63, %p64
      %p66 = scmp.ne.s32.totalorder %s52, %s53
      %p67 = scmp.eq.s32.totalorder %s19, 1
      %p68 = por %p66, %p67
      %p70 = scmp.ne.s32.totalorder %s53, %s69
      %p71 = scmp.eq.s32.totalorder %s19, 0
      %p72 = por %p70, %p71
      %p73 = scmp.le.s32.totalorder 1, %s13
      %p74 = scmp.lt.s32.totalorder %s13, 3
      %p75 = pnand %p73, %p74
      %p76 = pneg %p75
      // Predicated region
      $region9: #{tpu_custom_call.1} parent=5 // pred_check
        _
      $region10: #{tpu_custom_call.1} parent=5 // pred_check_branch
        %78 = sbr.rel (%p75) target = $region12
      $region11: #{tpu_custom_call.1} parent=5 // pred_region
        %s79 = ssub.s32 %s13, 1
      $region12: #{tpu_custom_call.1} parent=5 // pred_fallthru
        _
      %p80 = scmp.lt.s32.totalorder %s13, 2
      // Predicated region
      $region13: #{tpu_custom_call.1} parent=5 // pred_check
        %p81 = pneg %p80
      $region14: #{tpu_custom_call.1} parent=5 // pred_check_branch
        %83 = sbr.rel (%p81) target = $region16
      $region15: #{tpu_custom_call.1} parent=5 // pred_region
        // Predicated region
        $region17: #{tpu_custom_call.1} parent=15 // pred_check
          %p84 = pneg %p33
        $region18: #{tpu_custom_call.1} parent=15 // pred_check_branch
          %86 = sbr.rel (%p84) target = $region20
        $region19: #{tpu_custom_call.1} parent=15 // pred_region
          %s87 = sand.u32 %s23, 1
          %s88 = scalar_lea.sflag [#allocation5], %s87
          %s89 = sand.u32 %s23, 1
          %s90 = smul.addr %s89, 48
          %s91 = scalar_lea.vmem [#allocation4], %s90
          %s92 = smul.u32 3, %s13
          %s94 = ssub.s32 768, 768
          %95 = vsyncadd %s88, %s94
          %s96 = smul.addr %s92, 2
          %s97 = smul.addr %s96, 128
          %s98 = scalar_lea.hbm %s0, %s97
          %s99 = sshll.u32 %s91, 4
          %s100 = int_to_ptr.vmem [resolvable:$true] %s99
          %105 = dma.hbm_to_vmem [thread:$0]  %s98, 768, %s100, %s88, 128, 128, 8
        $region20: #{tpu_custom_call.1} parent=15 // pred_fallthru
          _
      $region16: #{tpu_custom_call.1} parent=5 // pred_fallthru
        _
      %p106 = scmp.le.s32.totalorder 1, %s13
      %p107 = scmp.lt.s32.totalorder %s13, 3
      %p108 = pnand %p106, %p107
      %p109 = pneg %p108
      // Predicated region
      $region21: #{tpu_custom_call.1} parent=5 // pred_check
        _
      $region22: #{tpu_custom_call.1} parent=5 // pred_check_branch
        %111 = sbr.rel (%p108) target = $region24
      $region23: #{tpu_custom_call.1} parent=5 // pred_region
        %s112 = ssub.s32 %s13, 1
        %s113 = sand.u32 %s26, 1
        %s114 = scalar_lea.sflag [#allocation5], %s113
        %s115 = sand.u32 %s26, 1
        %s116 = smul.addr %s115, 48
        %s117 = scalar_lea.vmem [#allocation4], %s116
        // Predicated region
        $region25: #{tpu_custom_call.1} parent=23 // pred_check
          %p118 = pneg %p39
        $region26: #{tpu_custom_call.1} parent=23 // pred_check_branch
          %120 = sbr.rel (%p118) target = $region28
        $region27: #{tpu_custom_call.1} parent=23 // pred_region
          %121 = dma.done %s114, 768
        $region28: #{tpu_custom_call.1} parent=23 // pred_fallthru
          _
        %s122 = sand.u32 %s26, 1
        %s123 = scalar_lea.sflag [#allocation5], %s122
        %s124 = sand.u32 %s26, 1
        %s125 = smul.addr %s124, 48
        %s126 = scalar_lea.vmem [#allocation4], %s125
        %p127 = pneg %p39
        %p128 = pneg %p36
        %p129 = pneg %p65
        %p130 = pneg %p62
        %s131 = sand.u32 %s52, 1
        %s132 = scalar_lea.sflag [#allocation6], %s131
        %s133 = sand.u32 %s52, 1
        %s134 = smul.addr %s133, 72
        %s135 = scalar_lea.vmem [#allocation7], %s134
        %s136 = smul.u32 3, %s18
        %s137 = smul.u32 3, %s18
        %vm138 = vcmask 191488
        %139 = vst.msk [vmem:[#allocation2] sm:$0xf] %vm138, 0.0
        %140 = vst.msk [vmem:[#allocation2 + $0x18] sm:$0xf] %vm138, 0.0
        %141 = vst.msk [vmem:[#allocation2 + $0x30] sm:$0xf] %vm138, 0.0
        %142 = vst.msk [vmem:[#allocation2 + $0x14] sm:$0xf] %vm138, 0.0
        %143 = vst.msk [vmem:[#allocation2 + $0x2c] sm:$0xf] %vm138, 0.0
        %144 = vst.msk [vmem:[#allocation2 + $0x44] sm:$0xf] %vm138, 0.0
        %vm145 = vcmask 31744
        %146 = vst.msk [vmem:[#allocation2 + $0x4] sm:$0xff] %vm145, 0.0
        %147 = vst.msk [vmem:[#allocation2 + $0xc] sm:$0xff] %vm145, 0.0
        %148 = vst.msk [vmem:[#allocation2 + $0x1c] sm:$0xff] %vm145, 0.0
        %149 = vst.msk [vmem:[#allocation2 + $0x24] sm:$0xff] %vm145, 0.0
        %150 = vst.msk [vmem:[#allocation2 + $0x34] sm:$0xff] %vm145, 0.0
        %151 = vst.msk [vmem:[#allocation2 + $0x3c] sm:$0xff] %vm145, 0.0
        %vm152 = vcmask 195744
        %153 = vst.msk [vmem:[#allocation2 + $0x4] sm:$0xff] %vm152, 0.0
        %154 = vst.msk [vmem:[#allocation2 + $0xc] sm:$0xff] %vm152, 0.0
        %155 = vst.msk [vmem:[#allocation2 + $0x1c] sm:$0xff] %vm152, 0.0
        %156 = vst.msk [vmem:[#allocation2 + $0x24] sm:$0xff] %vm152, 0.0
        %157 = vst.msk [vmem:[#allocation2 + $0x34] sm:$0xff] %vm152, 0.0
        %158 = vst.msk [vmem:[#allocation2 + $0x3c] sm:$0xff] %vm152, 0.0
        %v159 = vld [vmem:[%s117] sm:$0xff]
        %v160 = vld [vmem:[%s117 + $0x8] sm:$0xff]
        %v161 = vld [vmem:[%s117 + $0x10] sm:$0xff]
        %v162 = vld [vmem:[%s117 + $0x18] sm:$0xff]
        %v163 = vld [vmem:[%s117 + $0x20] sm:$0xff]
        %v164 = vld [vmem:[%s117 + $0x28] sm:$0xff]
        %171 = vrot.lane.b32.xlu0 %v159, 4
        %v172 = vpop.permute.xlu0 %171
        %173 = vrot.lane.b32.xlu0 %v160, 4
        %v174 = vpop.permute.xlu0 %173
        %175 = vrot.lane.b32.xlu0 %v161, 4
        %v176 = vpop.permute.xlu0 %175
        %177 = vrot.lane.b32.xlu0 %v162, 4
        %v178 = vpop.permute.xlu0 %177
        %179 = vrot.lane.b32.xlu0 %v163, 4
        %v180 = vpop.permute.xlu0 %179
        %181 = vrot.lane.b32.xlu0 %v164, 4
        %v182 = vpop.permute.xlu0 %181
        %vm189 = vcmask 162848
        %190 = vst.msk [vmem:[#allocation2 + $0x4] sm:$0xff] %vm189, %v172
        %191 = vst.msk [vmem:[#allocation2 + $0xc] sm:$0xff] %vm189, %v174
        %192 = vst.msk [vmem:[#allocation2 + $0x1c] sm:$0xff] %vm189, %v176
        %193 = vst.msk [vmem:[#allocation2 + $0x24] sm:$0xff] %vm189, %v178
        %194 = vst.msk [vmem:[#allocation2 + $0x34] sm:$0xff] %vm189, %v180
        %195 = vst.msk [vmem:[#allocation2 + $0x3c] sm:$0xff] %vm189, %v182
        %v196 = vld [vmem:[#allocation2] sm:$0xff]
        %v197 = vld [vmem:[#allocation2 + $0x8] sm:$0xff]
        %v198 = vld [vmem:[#allocation2 + $0x10] sm:$0xff]
        %v199 = vld [vmem:[#allocation2 + $0x18] sm:$0xff]
        %v200 = vld [vmem:[#allocation2 + $0x20] sm:$0xff]
        %v201 = vld [vmem:[#allocation2 + $0x28] sm:$0xff]
        %v202 = vld [vmem:[#allocation2 + $0x30] sm:$0xff]
        %v203 = vld [vmem:[#allocation2 + $0x38] sm:$0xff]
        %v204 = vld [vmem:[#allocation2 + $0x40] sm:$0xff]
        %v205 = vmul.f32 %v196, 0.026913157
        %v206 = vmul.f32 %v197, 0.026913157
        %v207 = vmul.f32 %v198, 0.026913157
        %v208 = vmul.f32 %v199, 0.026913157
        %v209 = vmul.f32 %v200, 0.026913157
        %v210 = vmul.f32 %v201, 0.026913157
        %v211 = vmul.f32 %v202, 0.026913157
        %v212 = vmul.f32 %v203, 0.026913157
        %v213 = vmul.f32 %v204, 0.026913157
        %v214 = vmul.f32 %v196, 0.23336768
        %v215 = vmul.f32 %v197, 0.23336768
        %v216 = vmul.f32 %v198, 0.23336768
        %v217 = vmul.f32 %v199, 0.23336768
        %v218 = vmul.f32 %v200, 0.23336768
        %v219 = vmul.f32 %v201, 0.23336768
        %v220 = vmul.f32 %v202, 0.23336768
        %v221 = vmul.f32 %v203, 0.23336768
        %v222 = vmul.f32 %v204, 0.23336768
        %232 = vrot.lane.b32.xlu0 %v214, 127
        %v233 = vpop.permute.xlu0 %232
        %234 = vrot.lane.b32.xlu0 %v215, 127
        %v235 = vpop.permute.xlu0 %234
        %236 = vrot.lane.b32.xlu0 %v216, 127
        %v237 = vpop.permute.xlu0 %236
        %238 = vrot.lane.b32.xlu0 %v217, 127
        %v239 = vpop.permute.xlu0 %238
        %240 = vrot.lane.b32.xlu0 %v218, 127
        %v241 = vpop.permute.xlu0 %240
        %242 = vrot.lane.b32.xlu0 %v219, 127
        %v243 = vpop.permute.xlu0 %242
        %244 = vrot.lane.b32.xlu0 %v220, 127
        %v245 = vpop.permute.xlu0 %244
        %246 = vrot.lane.b32.xlu0 %v221, 127
        %v247 = vpop.permute.xlu0 %246
        %248 = vrot.lane.b32.xlu0 %v222, 127
        %v249 = vpop.permute.xlu0 %248
        %v259 = vadd.f32 %v205, %v233
        %v260 = vadd.f32 %v206, %v235
        %v261 = vadd.f32 %v207, %v237
        %v262 = vadd.f32 %v208, %v239
        %v263 = vadd.f32 %v209, %v241
        %v264 = vadd.f32 %v210, %v243
        %v265 = vadd.f32 %v211, %v245
        %v266 = vadd.f32 %v212, %v247
        %v267 = vadd.f32 %v213, %v249
        %v268 = vmul.f32 %v196, 0.4794383
        %v269 = vmul.f32 %v197, 0.4794383
        %v270 = vmul.f32 %v198, 0.4794383
        %v271 = vmul.f32 %v199, 0.4794383
        %v272 = vmul.f32 %v200, 0.4794383
        %v273 = vmul.f32 %v201, 0.4794383
        %v274 = vmul.f32 %v202, 0.4794383
        %v275 = vmul.f32 %v203, 0.4794383
        %v276 = vmul.f32 %v204, 0.4794383
        %v277 = vadd.f32 %v268, %v233
        %v278 = vadd.f32 %v269, %v235
        %v279 = vadd.f32 %v270, %v237
        %v280 = vadd.f32 %v271, %v239
        %v281 = vadd.f32 %v272, %v241
        %v282 = vadd.f32 %v273, %v243
        %v283 = vadd.f32 %v274, %v245
        %v284 = vadd.f32 %v275, %v247
        %v285 = vadd.f32 %v276, %v249
        %295 = vrot.lane.b32.xlu0 %v205, 124
        %v296 = vpop.permute.xlu0 %295
        %297 = vrot.lane.b32.xlu0 %v206, 124
        %v298 = vpop.permute.xlu0 %297
        %299 = vrot.lane.b32.xlu0 %v207, 124
        %v300 = vpop.permute.xlu0 %299
        %301 = vrot.lane.b32.xlu0 %v208, 124
        %v302 = vpop.permute.xlu0 %301
        %303 = vrot.lane.b32.xlu0 %v209, 124
        %v304 = vpop.permute.xlu0 %303
        %305 = vrot.lane.b32.xlu0 %v210, 124
        %v306 = vpop.permute.xlu0 %305
        %307 = vrot.lane.b32.xlu0 %v211, 124
        %v308 = vpop.permute.xlu0 %307
        %309 = vrot.lane.b32.xlu0 %v212, 124
        %v310 = vpop.permute.xlu0 %309
        %311 = vrot.lane.b32.xlu0 %v213, 124
        %v312 = vpop.permute.xlu0 %311
        %v322 = vadd.f32 %v259, %v296
        %v323 = vadd.f32 %v260, %v298
        %v324 = vadd.f32 %v261, %v300
        %v325 = vadd.f32 %v262, %v302
        %v326 = vadd.f32 %v263, %v304
        %v327 = vadd.f32 %v264, %v306
        %v328 = vadd.f32 %v265, %v308
        %v329 = vadd.f32 %v266, %v310
        %v330 = vadd.f32 %v267, %v312
        %340 = vrot.lane.b32.xlu0 %v277, 126
        %v341 = vpop.permute.xlu0 %340
        %342 = vrot.lane.b32.xlu0 %v278, 126
        %v343 = vpop.permute.xlu0 %342
        %344 = vrot.lane.b32.xlu0 %v279, 126
        %v345 = vpop.permute.xlu0 %344
        %346 = vrot.lane.b32.xlu0 %v280, 126
        %v347 = vpop.permute.xlu0 %346
        %348 = vrot.lane.b32.xlu0 %v281, 126
        %v349 = vpop.permute.xlu0 %348
        %350 = vrot.lane.b32.xlu0 %v282, 126
        %v351 = vpop.permute.xlu0 %350
        %352 = vrot.lane.b32.xlu0 %v283, 126
        %v353 = vpop.permute.xlu0 %352
        %354 = vrot.lane.b32.xlu0 %v284, 126
        %v355 = vpop.permute.xlu0 %354
        %356 = vrot.lane.b32.xlu0 %v285, 126
        %v357 = vpop.permute.xlu0 %356
        %v367 = vadd.f32 %v322, %v341
        %v368 = vadd.f32 %v323, %v343
        %v369 = vadd.f32 %v324, %v345
        %v370 = vadd.f32 %v325, %v347
        %v371 = vadd.f32 %v326, %v349
        %v372 = vadd.f32 %v327, %v351
        %v373 = vadd.f32 %v328, %v353
        %v374 = vadd.f32 %v329, %v355
        %v375 = vadd.f32 %v330, %v357
        %vm376 = vcmask 162816
        %377 = vst.msk [vmem:[#allocation3] sm:$0xff] %vm376, %v367
        %378 = vst.msk [vmem:[#allocation3 + $0x8] sm:$0xff] %vm376, %v368
        %379 = vst.msk [vmem:[#allocation3 + $0x10] sm:$0xff] %vm376, %v369
        %380 = vst.msk [vmem:[#allocation3 + $0x18] sm:$0xff] %vm376, %v370
        %381 = vst.msk [vmem:[#allocation3 + $0x20] sm:$0xff] %vm376, %v371
        %382 = vst.msk [vmem:[#allocation3 + $0x28] sm:$0xff] %vm376, %v372
        %383 = vst.msk [vmem:[#allocation3 + $0x30] sm:$0xff] %vm376, %v373
        %384 = vst.msk [vmem:[#allocation3 + $0x38] sm:$0xff] %vm376, %v374
        %385 = vst.msk [vmem:[#allocation3 + $0x40] sm:$0xff] %vm376, %v375
        %v386 = vld [vmem:[#allocation3] sm:$0xff]
        %v387 = vld [vmem:[#allocation3 + $0x8] sm:$0xff]
        %v388 = vld [vmem:[#allocation3 + $0x10] sm:$0xf]
        %v389 = vld [vmem:[#allocation3 + $0x18] sm:$0xff]
        %v390 = vld [vmem:[#allocation3 + $0x20] sm:$0xff]
        %v391 = vld [vmem:[#allocation3 + $0x28] sm:$0xf]
        %v392 = vld [vmem:[#allocation3 + $0x30] sm:$0xff]
        %v393 = vld [vmem:[#allocation3 + $0x38] sm:$0xff]
        %v394 = vld [vmem:[#allocation3 + $0x40] sm:$0xf]
        %v395 = vmul.f32 %v386, 0.026913157
        %v396 = vmul.f32 %v387, 0.026913157
        %v397 = vmul.f32 %v388, 0.026913157
        %v398 = vmul.f32 %v389, 0.026913157
        %v399 = vmul.f32 %v390, 0.026913157
        %v400 = vmul.f32 %v391, 0.026913157
        %v401 = vmul.f32 %v392, 0.026913157
        %v402 = vmul.f32 %v393, 0.026913157
        %v403 = vmul.f32 %v394, 0.026913157
        %v404 = vld [vmem:[#allocation3 + $0x1] sm:$0xff]
        %v405 = vld [vmem:[#allocation3 + $0x9] sm:$0xff]
        %v406 = vld [vmem:[#allocation3 + $0x11] sm:$0xf]
        %v407 = vld [vmem:[#allocation3 + $0x19] sm:$0xff]
        %v408 = vld [vmem:[#allocation3 + $0x21] sm:$0xff]
        %v409 = vld [vmem:[#allocation3 + $0x29] sm:$0xf]
        %v410 = vld [vmem:[#allocation3 + $0x31] sm:$0xff]
        %v411 = vld [vmem:[#allocation3 + $0x39] sm:$0xff]
        %v412 = vld [vmem:[#allocation3 + $0x41] sm:$0xf]
        %v413 = vmul.f32 %v404, 0.23336768
        %v414 = vmul.f32 %v405, 0.23336768
        %v415 = vmul.f32 %v406, 0.23336768
        %v416 = vmul.f32 %v407, 0.23336768
        %v417 = vmul.f32 %v408, 0.23336768
        %v418 = vmul.f32 %v409, 0.23336768
        %v419 = vmul.f32 %v410, 0.23336768
        %v420 = vmul.f32 %v411, 0.23336768
        %v421 = vmul.f32 %v412, 0.23336768
        %v422 = vadd.f32 %v395, %v413
        %v423 = vadd.f32 %v396, %v414
        %v424 = vadd.f32 %v397, %v415
        %v425 = vadd.f32 %v398, %v416
        %v426 = vadd.f32 %v399, %v417
        %v427 = vadd.f32 %v400, %v418
        %v428 = vadd.f32 %v401, %v419
        %v429 = vadd.f32 %v402, %v420
        %v430 = vadd.f32 %v403, %v421
        %v431 = vld [vmem:[#allocation3 + $0x2] sm:$0xff]
        %v432 = vld [vmem:[#allocation3 + $0xa] sm:$0xff]
        %v433 = vld [vmem:[#allocation3 + $0x12] sm:$0xf]
        %v434 = vld [vmem:[#allocation3 + $0x1a] sm:$0xff]
        %v435 = vld [vmem:[#allocation3 + $0x22] sm:$0xff]
        %v436 = vld [vmem:[#allocation3 + $0x2a] sm:$0xf]
        %v437 = vld [vmem:[#allocation3 + $0x32] sm:$0xff]
        %v438 = vld [vmem:[#allocation3 + $0x3a] sm:$0xff]
        %v439 = vld [vmem:[#allocation3 + $0x42] sm:$0xf]
        %v440 = vmul.f32 %v431, 0.4794383
        %v441 = vmul.f32 %v432, 0.4794383
        %v442 = vmul.f32 %v433, 0.4794383
        %v443 = vmul.f32 %v434, 0.4794383
        %v444 = vmul.f32 %v435, 0.4794383
        %v445 = vmul.f32 %v436, 0.4794383
        %v446 = vmul.f32 %v437, 0.4794383
        %v447 = vmul.f32 %v438, 0.4794383
        %v448 = vmul.f32 %v439, 0.4794383
        %v449 = vld [vmem:[#allocation3 + $0x3] sm:$0xff]
        %v450 = vld [vmem:[#allocation3 + $0xb] sm:$0xff]
        %v451 = vld [vmem:[#allocation3 + $0x13] sm:$0xf]
        %v452 = vld [vmem:[#allocation3 + $0x1b] sm:$0xff]
        %v453 = vld [vmem:[#allocation3 + $0x23] sm:$0xff]
        %v454 = vld [vmem:[#allocation3 + $0x2b] sm:$0xf]
        %v455 = vld [vmem:[#allocation3 + $0x33] sm:$0xff]
        %v456 = vld [vmem:[#allocation3 + $0x3b] sm:$0xff]
        %v457 = vld [vmem:[#allocation3 + $0x43] sm:$0xf]
        %v458 = vmul.f32 %v449, 0.23336768
        %v459 = vmul.f32 %v450, 0.23336768
        %v460 = vmul.f32 %v451, 0.23336768
        %v461 = vmul.f32 %v452, 0.23336768
        %v462 = vmul.f32 %v453, 0.23336768
        %v463 = vmul.f32 %v454, 0.23336768
        %v464 = vmul.f32 %v455, 0.23336768
        %v465 = vmul.f32 %v456, 0.23336768
        %v466 = vmul.f32 %v457, 0.23336768
        %v467 = vadd.f32 %v440, %v458
        %v468 = vadd.f32 %v441, %v459
        %v469 = vadd.f32 %v442, %v460
        %v470 = vadd.f32 %v443, %v461
        %v471 = vadd.f32 %v444, %v462
        %v472 = vadd.f32 %v445, %v463
        %v473 = vadd.f32 %v446, %v464
        %v474 = vadd.f32 %v447, %v465
        %v475 = vadd.f32 %v448, %v466
        %v476 = vld [vmem:[#allocation3 + $0x4] sm:$0xff]
        %v477 = vld [vmem:[#allocation3 + $0xc] sm:$0xff]
        %v478 = vld [vmem:[#allocation3 + $0x14] sm:$0xf]
        %v479 = vld [vmem:[#allocation3 + $0x1c] sm:$0xff]
        %v480 = vld [vmem:[#allocation3 + $0x24] sm:$0xff]
        %v481 = vld [vmem:[#allocation3 + $0x2c] sm:$0xf]
        %v482 = vld [vmem:[#allocation3 + $0x34] sm:$0xff]
        %v483 = vld [vmem:[#allocation3 + $0x3c] sm:$0xff]
        %v484 = vld [vmem:[#allocation3 + $0x44] sm:$0xf]
        %v485 = vmul.f32 %v476, 0.026913157
        %v486 = vmul.f32 %v477, 0.026913157
        %v487 = vmul.f32 %v478, 0.026913157
        %v488 = vmul.f32 %v479, 0.026913157
        %v489 = vmul.f32 %v480, 0.026913157
        %v490 = vmul.f32 %v481, 0.026913157
        %v491 = vmul.f32 %v482, 0.026913157
        %v492 = vmul.f32 %v483, 0.026913157
        %v493 = vmul.f32 %v484, 0.026913157
        %v494 = vadd.f32 %v422, %v485
        %v495 = vadd.f32 %v423, %v486
        %v496 = vadd.f32 %v424, %v487
        %v497 = vadd.f32 %v425, %v488
        %v498 = vadd.f32 %v426, %v489
        %v499 = vadd.f32 %v427, %v490
        %v500 = vadd.f32 %v428, %v491
        %v501 = vadd.f32 %v429, %v492
        %v502 = vadd.f32 %v430, %v493
        %v503 = vadd.f32 %v494, %v467
        %v504 = vadd.f32 %v495, %v468
        %v505 = vadd.f32 %v496, %v469
        %v506 = vadd.f32 %v497, %v470
        %v507 = vadd.f32 %v498, %v471
        %v508 = vadd.f32 %v499, %v472
        %v509 = vadd.f32 %v500, %v473
        %v510 = vadd.f32 %v501, %v474
        %v511 = vadd.f32 %v502, %v475
        %512 = vst.msk [vmem:[%s135] sm:$0xff] %vm376, %v503
        %513 = vst.msk [vmem:[%s135 + $0x8] sm:$0xff] %vm376, %v504
        %vm514 = vcmask 158720
        %515 = vst.msk [vmem:[%s135 + $0x10] sm:$0xf] %vm514, %v505
        %516 = vst.msk [vmem:[%s135 + $0x18] sm:$0xff] %vm376, %v506
        %517 = vst.msk [vmem:[%s135 + $0x20] sm:$0xff] %vm376, %v507
        %518 = vst.msk [vmem:[%s135 + $0x28] sm:$0xf] %vm514, %v508
        %519 = vst.msk [vmem:[%s135 + $0x30] sm:$0xff] %vm376, %v509
        %520 = vst.msk [vmem:[%s135 + $0x38] sm:$0xff] %vm376, %v510
        %521 = vst.msk [vmem:[%s135 + $0x40] sm:$0xf] %vm514, %v511
        %s522 = sand.u32 %s52, 1
        %s523 = scalar_lea.sflag [#allocation6], %s522
        %s524 = sand.u32 %s52, 1
        %s525 = smul.addr %s524, 72
        %s526 = scalar_lea.vmem [#allocation7], %s525
        // Predicated region
        $region29: #{tpu_custom_call.1} parent=23 // pred_check
          %p527 = pneg %p62
        $region30: #{tpu_custom_call.1} parent=23 // pred_check_branch
          %529 = sbr.rel (%p527) target = $region32
        $region31: #{tpu_custom_call.1} parent=23 // pred_region
          %s530 = smul.u32 3, %s18
          %s532 = ssub.s32 1152, 1152
          %533 = vsyncadd %s523, %s532
          %s534 = smul.addr %s530, 3
          %s535 = smul.addr %s534, 128
          %s536 = scalar_lea.hbm %s1, %s535
          %s537 = sshll.u32 %s526, 4
          %s538 = int_to_ptr.vmem [resolvable:$true] %s537
          %543 = dma.vmem_to_hbm [thread:$0]  %s538, 1152, %s536, %s523, 128, 128, 8
        $region32: #{tpu_custom_call.1} parent=23 // pred_fallthru
          _
      $region24: #{tpu_custom_call.1} parent=5 // pred_fallthru
        _
      %p544 = scmp.le.s32.totalorder 2, %s13
      // Predicated region
      $region33: #{tpu_custom_call.1} parent=5 // pred_check
        %p545 = pneg %p544
      $region34: #{tpu_custom_call.1} parent=5 // pred_check_branch
        %547 = sbr.rel (%p545) target = $region36
      $region35: #{tpu_custom_call.1} parent=5 // pred_region
        %s548 = ssub.s32 %s13, 2
        // Predicated region
        $region37: #{tpu_custom_call.1} parent=35 // pred_check
          %p549 = pneg %p68
        $region38: #{tpu_custom_call.1} parent=35 // pred_check_branch
          %551 = sbr.rel (%p549) target = $region40
        $region39: #{tpu_custom_call.1} parent=35 // pred_region
          %s552 = sand.u32 %s53, 1
          %s553 = scalar_lea.sflag [#allocation6], %s552
          %s554 = sand.u32 %s53, 1
          %s555 = smul.addr %s554, 72
          %s556 = scalar_lea.vmem [#allocation7], %s555
          %557 = dma.done %s553, 1152
        $region40: #{tpu_custom_call.1} parent=35 // pred_fallthru
          _
      $region36: #{tpu_custom_call.1} parent=5 // pred_fallthru
        _
    $region6: #{tpu_custom_call.1} parent=1 // loop_footer
      %s17 = sadd.s32 1, %s13
    $region7: #{tpu_custom_call.1} parent=1 // loop_footer_branch
      %12 = sbr.rel target = $region3
    $region8: #{tpu_custom_call.1} parent=1 // loop_exit
      _
    %558 = vsyncpa [#allocation5], 1
    %s559 = scalar_lea.sflag [#allocation5], 1
    %560 = vsyncpa %s559, 1
    %561 = vsyncpa [#allocation6], 1
    %s562 = scalar_lea.sflag [#allocation6], 1
    %563 = vsyncpa %s562, 1

</llo_original>
